<compile_context>
chip_gen: v7x
topology: tpu7x:2x2x1
jax: 0.10.0
libtpu: 0.0.40
codegen_flags: <defaults>
</compile_context>

<pallas_src>
import functools

import jax
import jax.numpy as jnp
from jax.experimental import pallas as pl
from jax.experimental.pallas import tpu as pltpu


def _round_up(n, m):
    return ((n + m - 1) // m) * m


def encoder_kernel(x_ref, w12_ref, wh_ref, bias_ref, eps_ref, out_ref, *,
                   precision=None):
    """One batch tile: (TB, input_dim) -> (TB, 3*latent) packed as [z | mu | var]."""
    h1 = w12_ref.shape[-1]          # hidden_dim = layers[-1]
    latent = eps_ref.shape[-1]

    # Packed biases: row 0 = b12 (width h1), row 1 = [bmu | bvar] (width 2*latent).
    # Static slices -> no runtime cost.
    b12 = bias_ref[0:1, 0:h1]
    bh = bias_ref[1:2, 0:2 * latent]

    # Folded trunk: tanh(x @ (W1 @ W2) + (b1 @ W2 + b2)).  Accumulate in f32.
    h = jnp.tanh(
        jnp.dot(x_ref[...], w12_ref[...],
                preferred_element_type=jnp.float32, precision=precision) + b12)

    # Fused mu/var head: one (h1, 2*latent) matmul, then lane-slice.
    # (h cast matches the head weight dtype: no-op for f32, bf16 cast for the
    #  bf16-operand path; accumulation stays f32.)
    head = jnp.dot(h.astype(wh_ref.dtype), wh_ref[...],
                   preferred_element_type=jnp.float32, precision=precision) + bh
    mu = head[:, 0:latent]
    logvar = head[:, latent:2 * latent]

    # Fused epilogue: sqrt(max(exp(x),1e-20)) == max(exp(x/2),1e-10); var = std^2.
    # One EUP op (exp) instead of exp + sqrt; mul/max ride the VPU.
    std = jnp.maximum(jnp.exp(0.5 * logvar), jnp.float32(1e-10))
    var = std * std
    z = mu + std * eps_ref[...]

    # Single packed output store: [z | mu | var] -> one output DMA per tile.
    # NOTE: 3*latent = 48 (<128) lanes -> masked stores; acceptable here since the
    # kernel is overhead/HBM-bound.  For production latent (3*latent >= 128),
    # round the packed width up to a multiple of 128 for unmasked vst.
    out_ref[...] = jnp.concatenate([z, mu, var], axis=-1)


def fold_params(params):
    """Fold Linear(input,h0) ∘ Linear(h0,h1) (no nonlinearity between them) and
    fuse the mu/var heads.  Done once per checkpoint in a real model."""
    hp = jax.lax.Precision.HIGHEST   # fold in full f32 (tiny, one-time cost)
    w12 = jnp.dot(params["w1"], params["w2"], precision=hp)                 # (D, h1)
    b12 = jnp.dot(params["b1"], params["w2"], precision=hp) + params["b2"]  # (1, h1)
    w_head = jnp.concatenate([params["wmu"], params["wvar"]], axis=1)       # (h1, 2L)
    b_head = jnp.concatenate([params["bmu"], params["bvar"]], axis=1)       # (1, 2L)
    return w12, b12, w_head, b_head


def encoder_forward(x, params, eps, *, block_b=None, num_batch_tiles=1,
                    matmul_dtype=jnp.float32, precision=None):
    """Runs the encoder hot path as one batch-tiled Pallas kernel.

    num_batch_tiles: 1 (default) -> single grid step (best for v5e/v6e, 1 TC);
                     2 -> even split across v7x's two TensorCores via
                     dimension_semantics=("parallel",).
    matmul_dtype:    jnp.bfloat16 casts x/W12/W_head for the MXU (v6e/v7x fast
                     path); accumulation and the tanh/exp epilogue stay f32.

    Returns (z, mu, var), each of shape (B, latent_dim), float32.
    """
    B, input_dim = x.shape
    latent = eps.shape[-1]
    h1 = params["w2"].shape[1]

    # ---- parameter packing (amortized; precomputed once in a real model) ----
    w12, b12, w_head, b_head = fold_params(params)
    maxw = max(h1, 2 * latent)

    def _padrow(b):
        return jnp.pad(b, ((0, 0), (0, maxw - b.shape[1])))

    bias_pack = jnp.concatenate([_padrow(b12), _padrow(b_head)], axis=0)  # (2, maxw)

    if matmul_dtype == jnp.bfloat16:
        x_in = x.astype(jnp.bfloat16)
        w12 = w12.astype(jnp.bfloat16)
        w_head = w_head.astype(jnp.bfloat16)
        sub = 16                       # bf16 sublane packing
    else:
        x_in = x
        sub = 8

    # ---- batch tiling: one big tile by default (per-grid-step overhead ~0.35us
    # dwarfs the per-tile compute at these sizes).  No wrapper-side padding: the
    # last block may be ragged (OOB writes are dropped by Pallas).
    if block_b is None:
        block_b = pl.cdiv(B, max(1, int(num_batch_tiles)))
    block_b = min(_round_up(max(int(block_b), 1), sub), 4096, _round_up(B, sub))
    grid = (pl.cdiv(B, block_b),)

    # TODO(synk): if hidden dims / block_b grow in production, set
    # pltpu.CompilerParams(vmem_limit_bytes=...) from the per-tile working set
    # (x + eps + out + weights, double-buffered) and re-derive for v7x's 64 MiB.

    out_shape = jax.ShapeDtypeStruct((B, 3 * latent), jnp.float32)
    kernel = functools.partial(encoder_kernel, precision=precision)

    out = pl.pallas_call(
        kernel,
        out_shape=out_shape,
        grid_spec=pltpu.PrefetchScalarGridSpec(
            num_scalar_prefetch=0,
            grid=grid,
            in_specs=[
                # Batch-tiled, double-buffered by the pipeline:
                pl.BlockSpec((block_b, input_dim), lambda i: (i, 0)),    # x
                # Weights / biases: full block, VMEM-resident across all steps:
                pl.BlockSpec((input_dim, h1), lambda i: (0, 0)),         # W12
                pl.BlockSpec((h1, 2 * latent), lambda i: (0, 0)),        # [Wmu|Wvar]
                pl.BlockSpec((2, maxw), lambda i: (0, 0)),               # packed biases
                pl.BlockSpec((block_b, latent), lambda i: (i, 0)),       # eps
            ],
            out_specs=pl.BlockSpec((block_b, 3 * latent), lambda i: (i, 0)),
        ),
        compiler_params=pltpu.CompilerParams(
            dimension_semantics=("parallel",),     # batch axis: megacore-shardable
        ),
    )(x_in, w12, w_head, bias_pack, eps)

    z = out[:, 0:latent]
    mu = out[:, latent:2 * latent]
    var = out[:, 2 * latent:3 * latent]
    return z, mu, var


def init_params(key, input_dim, layers, latent_dim):
    """Deterministic synthetic parameters (PyTorch shapes, stored transposed)."""
    ks = jax.random.split(key, 8)
    hidden0, hidden1 = layers[0], layers[-1]
    scale = 0.1
    return {
        "w1":   scale * jax.random.normal(ks[0], (input_dim, hidden0), jnp.float32),
        "b1":   scale * jax.random.normal(ks[1], (1, hidden0), jnp.float32),
        "w2":   scale * jax.random.normal(ks[2], (hidden0, hidden1), jnp.float32),
        "b2":   scale * jax.random.normal(ks[3], (1, hidden1), jnp.float32),
        "wmu":  scale * jax.random.normal(ks[4], (hidden1, latent_dim), jnp.float32),
        "bmu":  scale * jax.random.normal(ks[5], (1, latent_dim), jnp.float32),
        "wvar": scale * jax.random.normal(ks[6], (hidden1, latent_dim), jnp.float32),
        "bvar": scale * jax.random.normal(ks[7], (1, latent_dim), jnp.float32),
    }


def reference_forward(x, params, eps):
    """Pure-JAX reference mirroring the PyTorch module structure exactly."""
    h1 = x @ params["w1"] + params["b1"]
    h2 = jnp.tanh(h1 @ params["w2"] + params["b2"])
    mu = h2 @ params["wmu"] + params["bmu"]
    var = jnp.maximum(jnp.exp(h2 @ params["wvar"] + params["bvar"]), 1e-20)
    z = mu + jnp.sqrt(var) * eps
    return z, mu, var


def reference_forward_folded(x, params, eps):
    """Pure-JAX reference with the SAME folded op structure as the kernel
    (same matmuls, same epilogue), used for a tight numerical check that is
    insensitive to whatever the TPU default f32 matmul precision is."""
    w12, b12, w_head, b_head = fold_params(params)
    latent = eps.shape[-1]
    h = jnp.tanh(jnp.dot(x, w12, preferred_element_type=jnp.float32) + b12)
    head = jnp.dot(h, w_head, preferred_element_type=jnp.float32) + b_head
    mu = head[:, :latent]
    logvar = head[:, latent:]
    std = jnp.maximum(jnp.exp(0.5 * logvar), 1e-10)
    var = std * std
    z = mu + std * eps
    return z, mu, var


if __name__ == "__main__":
    # Small shapes consistent with the module's MLP structure.
    batch = 64
    input_dim = 64
    layers = [64, 32]
    latent_dim = 16

    key = jax.random.PRNGKey(0)
    k_x, k_eps, k_p = jax.random.split(key, 3)

    x = jax.random.normal(k_x, (batch, input_dim), jnp.float32)
    eps = jax.random.normal(k_eps, (batch, latent_dim), jnp.float32)
    params = init_params(k_p, input_dim, layers, latent_dim)

    # ---- 1) f32 path, single batch tile (v5e/v6e default: one grid step) ----
    z, mu, var = encoder_forward(x, params, eps)
    jax.block_until_ready((z, mu, var))

    # Tight check against the structurally-matched folded reference.
    z_f, mu_f, var_f = reference_forward_folded(x, params, eps)
    assert jnp.allclose(z, z_f, atol=1e-4, rtol=1e-4)
    assert jnp.allclose(mu, mu_f, atol=1e-4, rtol=1e-4)
    assert jnp.allclose(var, var_f, atol=1e-4, rtol=1e-4)

    # Semantic check against the exact PyTorch-mirroring (unfused) reference.
    # Looser tolerance covers the W1∘W2 fold reassociation and the fact that the
    # TPU default f32 matmul precision may use reduced-precision MXU passes.
    z_r, mu_r, var_r = reference_forward(x, params, eps)
    assert jnp.allclose(z, z_r, atol=5e-2, rtol=5e-2)
    assert jnp.allclose(mu, mu_r, atol=5e-2, rtol=5e-2)
    assert jnp.allclose(var, var_r, atol=5e-2, rtol=5e-2)

    # ---- 2) f32 path, two batch tiles (v7x megacore-style split; exercises
    #         the batch pipeline and ("parallel",) semantics) ----
    z2, mu2, var2 = encoder_forward(x, params, eps, num_batch_tiles=2)
    jax.block_until_ready((z2, mu2, var2))
    assert jnp.allclose(z2, z_f, atol=1e-4, rtol=1e-4)
    assert jnp.allclose(mu2, mu_f, atol=1e-4, rtol=1e-4)
    assert jnp.allclose(var2, var_f, atol=1e-4, rtol=1e-4)

    # ---- 3) bf16 MXU-operand path (v6e/v7x fast path): f32 accumulate,
    #         f32 epilogue; loose smoke check vs the f32 reference ----
    z16, mu16, var16 = encoder_forward(x, params, eps, matmul_dtype=jnp.bfloat16)
    jax.block_until_ready((z16, mu16, var16))
    assert bool(jnp.all(jnp.isfinite(z16))) and bool(jnp.all(jnp.isfinite(var16)))
    assert jnp.allclose(mu16, mu_r, atol=0.1, rtol=0.1)
    assert jnp.allclose(z16, z_r, atol=0.1, rtol=0.1)

    print("KERNEL_OK")
</pallas_src>

<mosaic_0001>
module attributes {stable_mosaic.version = 11 : i64} {
  func.func @encoder_kernel(%arg0: i32, %arg1: memref<64x64xf32, #tpu.memory_space<vmem>>, %arg2: memref<64x32xf32, #tpu.memory_space<vmem>>, %arg3: memref<32x32xf32, #tpu.memory_space<vmem>>, %arg4: memref<2x32xf32, #tpu.memory_space<vmem>>, %arg5: memref<64x16xf32, #tpu.memory_space<vmem>>, %arg6: memref<64x48xf32, #tpu.memory_space<vmem>>) attributes {dimension_semantics = [#tpu.dimension_semantics<parallel>], iteration_bounds = array<i64: 1>, scalar_prefetch = 0 : i64, scratch_operands = 0 : i64, tpu.core_type = #tpu.core_type<tc>, window_params = [{transform_indices = @transform_0, window_bounds = array<i64: 64, 64>}, {pipeline_mode = #tpu.pipeline_mode<synchronous>, transform_indices = @transform_1, window_bounds = array<i64: 64, 32>}, {pipeline_mode = #tpu.pipeline_mode<synchronous>, transform_indices = @transform_2, window_bounds = array<i64: 32, 32>}, {pipeline_mode = #tpu.pipeline_mode<synchronous>, transform_indices = @transform_3, window_bounds = array<i64: 2, 32>}, {transform_indices = @transform_4, window_bounds = array<i64: 64, 16>}, {transform_indices = @transform_5, window_bounds = array<i64: 64, 48>}]} {
    %c0 = arith.constant 0 : index
    %c0_0 = arith.constant 0 : index
    %0 = vector.load %arg4[%c0, %c0_0] : memref<2x32xf32, #tpu.memory_space<vmem>>, vector<1x32xf32>
    %c1 = arith.constant 1 : index
    %c0_1 = arith.constant 0 : index
    %1 = vector.load %arg4[%c1, %c0_1] : memref<2x32xf32, #tpu.memory_space<vmem>>, vector<1x32xf32>
    %c0_2 = arith.constant 0 : index
    %c0_3 = arith.constant 0 : index
    %2 = vector.load %arg1[%c0_2, %c0_3] : memref<64x64xf32, #tpu.memory_space<vmem>>, vector<64x64xf32>
    %c0_4 = arith.constant 0 : index
    %c0_5 = arith.constant 0 : index
    %3 = vector.load %arg2[%c0_4, %c0_5] : memref<64x32xf32, #tpu.memory_space<vmem>>, vector<64x32xf32>
    %cst = arith.constant dense<0.000000e+00> : vector<64x32xf32>
    %4 = tpu.matmul %2, %3, %cst {dimension_numbers = #tpu.dot_dimension_numbers<[1], [0], [0], [1], [0, 0, 1, 1], [], []>} : vector<64x64xf32>, vector<64x32xf32>, vector<64x32xf32> -> vector<64x32xf32>
    %5 = vector.broadcast %0 : vector<1x32xf32> to vector<64x32xf32>
    %6 = arith.addf %4, %5 : vector<64x32xf32>
    %7 = math.tanh %6 : vector<64x32xf32>
    %c0_6 = arith.constant 0 : index
    %c0_7 = arith.constant 0 : index
    %8 = vector.load %arg3[%c0_6, %c0_7] : memref<32x32xf32, #tpu.memory_space<vmem>>, vector<32x32xf32>
    %cst_8 = arith.constant dense<0.000000e+00> : vector<64x32xf32>
    %9 = tpu.matmul %7, %8, %cst_8 {dimension_numbers = #tpu.dot_dimension_numbers<[1], [0], [0], [1], [0, 0, 1, 1], [], []>} : vector<64x32xf32>, vector<32x32xf32>, vector<64x32xf32> -> vector<64x32xf32>
    %10 = vector.broadcast %1 : vector<1x32xf32> to vector<64x32xf32>
    %11 = arith.addf %9, %10 : vector<64x32xf32>
    %12 = vector.extract_strided_slice %11 {offsets = [0, 0], sizes = [64, 16], strides = [1, 1]} : vector<64x32xf32> to vector<64x16xf32>
    %13 = vector.extract_strided_slice %11 {offsets = [0, 16], sizes = [64, 16], strides = [1, 1]} : vector<64x32xf32> to vector<64x16xf32>
    %cst_9 = arith.constant 5.000000e-01 : f32
    %14 = vector.broadcast %cst_9 : f32 to vector<64x16xf32>
    %15 = arith.mulf %14, %13 : vector<64x16xf32>
    %16 = math.exp %15 : vector<64x16xf32>
    %cst_10 = arith.constant 1.000000e-10 : f32
    %17 = vector.broadcast %cst_10 : f32 to vector<64x16xf32>
    %18 = arith.maximumf %16, %17 : vector<64x16xf32>
    %19 = arith.mulf %18, %18 : vector<64x16xf32>
    %c0_11 = arith.constant 0 : index
    %c0_12 = arith.constant 0 : index
    %20 = vector.load %arg5[%c0_11, %c0_12] : memref<64x16xf32, #tpu.memory_space<vmem>>, vector<64x16xf32>
    %21 = arith.mulf %18, %20 : vector<64x16xf32>
    %22 = arith.addf %12, %21 : vector<64x16xf32>
    %23 = tpu.concatenate %22, %12, %19 in 1 : vector<64x16xf32>, vector<64x16xf32>, vector<64x16xf32> -> vector<64x48xf32>
    %c0_13 = arith.constant 0 : index
    %c0_14 = arith.constant 0 : index
    %24 = vector.load %arg6[%c0_13, %c0_14] : memref<64x48xf32, #tpu.memory_space<vmem>>, vector<64x48xf32>
    tpu.vector_store %arg6[%c0_13, %c0_14], %23 {strides = array<i32>} : memref<64x48xf32, #tpu.memory_space<vmem>>, vector<64x48xf32>,
    return
  }
  func.func @transform_0(%arg0: i32) -> (i32, i32) {
    %c0_i32 = arith.constant 0 : i32
    %c0_i32_0 = arith.constant 0 : i32
    return %arg0, %c0_i32 : i32, i32
  }
  func.func @transform_1(%arg0: i32) -> (i32, i32) {
    %c0_i32 = arith.constant 0 : i32
    %c0_i32_0 = arith.constant 0 : i32
    %c0_i32_1 = arith.constant 0 : i32
    return %c0_i32, %c0_i32_0 : i32, i32
  }
  func.func @transform_2(%arg0: i32) -> (i32, i32) {
    %c0_i32 = arith.constant 0 : i32
    %c0_i32_0 = arith.constant 0 : i32
    %c0_i32_1 = arith.constant 0 : i32
    return %c0_i32, %c0_i32_0 : i32, i32
  }
  func.func @transform_3(%arg0: i32) -> (i32, i32) {
    %c0_i32 = arith.constant 0 : i32
    %c0_i32_0 = arith.constant 0 : i32
    %c0_i32_1 = arith.constant 0 : i32
    return %c0_i32, %c0_i32_0 : i32, i32
  }
  func.func @transform_4(%arg0: i32) -> (i32, i32) {
    %c0_i32 = arith.constant 0 : i32
    %c0_i32_0 = arith.constant 0 : i32
    return %arg0, %c0_i32 : i32, i32
  }
  func.func @transform_5(%arg0: i32) -> (i32, i32) {
    %c0_i32 = arith.constant 0 : i32
    %c0_i32_0 = arith.constant 0 : i32
    return %arg0, %c0_i32 : i32, i32
  }
}

</mosaic_0001>

<llo_original>
// kernel: tpu_custom_call.1
$region0: #{tpu_custom_call.1}
  #allocation0 [shape = 'u32[]', space=smem, size = 0x4, offset = 0x4, fixed_abs, tag = 'smem constant byte address 0x4 - core index']
  #allocation1 [shape = 'u32[144,128]{1,0:T(1,128)}', space=vmem, size = 0x12000, scoped, tag = 'internal scratch']
  %s0 = inlined_call_operand.vmem [shape: f32[64,64], index: 0, kind: input, shape index: {}]
  %s1 = inlined_call_operand.vmem [shape: f32[64,32], index: 1, kind: input, shape index: {}]
  %s2 = inlined_call_operand.vmem [shape: f32[32,32], index: 2, kind: input, shape index: {}]
  %s3 = inlined_call_operand.vmem [shape: f32[2,32], index: 3, kind: input, shape index: {}]
  %s4 = inlined_call_operand.vmem [shape: f32[64,16], index: 4, kind: input, shape index: {}]
  %s5 = inlined_call_operand.vmem [shape: f32[64,48], index: 5, kind: output, shape index: {}]
  %s6 = sld [smem:[#allocation0]]
  $region30: #{tpu_custom_call.1} parent=0
    _
  %s8 = ssub.s32 1, %s6
  %s9 = scalar_select 0, %s8, %s6
  // Predicated region
  $region2: #{tpu_custom_call.1} parent=0 // pred_check
    _
  $region3: #{tpu_custom_call.1} parent=0 // pred_check_branch
    %11 = sbr.rel (0) target = $region5
  $region4: #{tpu_custom_call.1} parent=0 // pred_region
    _
  $region5: #{tpu_custom_call.1} parent=0 // pred_fallthru
    _
  // Predicated region
  $region6: #{tpu_custom_call.1} parent=0 // pred_check
    _
  $region7: #{tpu_custom_call.1} parent=0 // pred_check_branch
    %13 = sbr.rel (0) target = $region9
  $region8: #{tpu_custom_call.1} parent=0 // pred_region
    _
  $region9: #{tpu_custom_call.1} parent=0 // pred_fallthru
    _
  // Predicated region
  $region10: #{tpu_custom_call.1} parent=0 // pred_check
    _
  $region11: #{tpu_custom_call.1} parent=0 // pred_check_branch
    %15 = sbr.rel (0) target = $region13
  $region12: #{tpu_custom_call.1} parent=0 // pred_region
    _
  $region13: #{tpu_custom_call.1} parent=0 // pred_fallthru
    _
  // Predicated region
  $region14: #{tpu_custom_call.1} parent=0 // pred_check
    _
  $region15: #{tpu_custom_call.1} parent=0 // pred_check_branch
    %17 = sbr.rel (0) target = $region17
  $region16: #{tpu_custom_call.1} parent=0 // pred_region
    _
  $region17: #{tpu_custom_call.1} parent=0 // pred_fallthru
    _
  // Predicated region
  $region18: #{tpu_custom_call.1} parent=0 // pred_check
    _
  $region19: #{tpu_custom_call.1} parent=0 // pred_check_branch
    %19 = sbr.rel (0) target = $region21
  $region20: #{tpu_custom_call.1} parent=0 // pred_region
    _
  $region21: #{tpu_custom_call.1} parent=0 // pred_fallthru
    _
  %v20 = vld [vmem:[%s3] sm:$0x1]
  %v21 = vld [vmem:[%s3 + $0x1] sm:$0x1]
  %v22 = vld [vmem:[%s0] sm:$0xff]
  %v23 = vld [vmem:[%s0 + $0x8] sm:$0xff]
  %v24 = vld [vmem:[%s0 + $0x10] sm:$0xff]
  %v25 = vld [vmem:[%s0 + $0x18] sm:$0xff]
  %v26 = vld [vmem:[%s0 + $0x20] sm:$0xff]
  %v27 = vld [vmem:[%s0 + $0x28] sm:$0xff]
  %v28 = vld [vmem:[%s0 + $0x30] sm:$0xff]
  %v29 = vld [vmem:[%s0 + $0x38] sm:$0xff]
  %v30 = vld [vmem:[%s1] sm:$0xff]
  %v31 = vld [vmem:[%s1 + $0x8] sm:$0xff]
  %v32 = vld [vmem:[%s1 + $0x10] sm:$0xff]
  %v33 = vld [vmem:[%s1 + $0x18] sm:$0xff]
  %v34 = vld [vmem:[%s1 + $0x20] sm:$0xff]
  %v35 = vld [vmem:[%s1 + $0x28] sm:$0xff]
  %v36 = vld [vmem:[%s1 + $0x30] sm:$0xff]
  %v37 = vld [vmem:[%s1 + $0x38] sm:$0xff]
  %v38 = vlaneseq
  %v39 = vshrl.u32 %v38, 7
  %v40 = vsub.s32 0, %v39
  %v41 = vrot.slane %v20, %v40
  %vm42 = vcmask 523264
  %v44 = vsel %vm42, %v22, 0
  %v47 = vsel %vm42, %v23, 0
  %v50 = vsel %vm42, %v24, 0
  %v53 = vsel %vm42, %v25, 0
  %v56 = vsel %vm42, %v26, 0
  %v59 = vsel %vm42, %v27, 0
  %v62 = vsel %vm42, %v28, 0
  %v65 = vsel %vm42, %v29, 0
  %67 = vmatprep.subr.mxu0 0.0
  %68 = vmatpush1.msra.mxu0 %v30
  %69 = vmatprep.subr.mxu0 0.0
  %70 = vmatpush1.msra.mxu0 %v31
  %71 = vmatprep.subr.mxu0 0.0
  %72 = vmatpush1.msra.mxu0 %v32
  %73 = vmatprep.subr.mxu0 0.0
  %74 = vmatpush1.msra.mxu0 %v33
  %75 = vmatprep.subr.mxu0 0.0
  %76 = vmatpush1.msra.mxu0 %v34
  %77 = vmatprep.subr.mxu0 0.0
  %78 = vmatpush1.msra.mxu0 %v35
  %79 = vmatprep.subr.mxu0 0.0
  %80 = vmatpush1.msra.mxu0 %v36
  %81 = vmatprep.subr.mxu0 0.0
  %82 = vmatpush1.msra.mxu0 %v37
  %83 = vmatprep.subr.mxu0 0.0
  %84 = vmatpush1.msra.mxu0 0.0
  %85 = vmatprep.subr.mxu0 0.0
  %86 = vmatpush1.msra.mxu0 0.0
  %87 = vmatprep.subr.mxu0 0.0
  %88 = vmatpush1.msra.mxu0 0.0
  %89 = vmatprep.subr.mxu0 0.0
  %90 = vmatpush1.msra.mxu0 0.0
  %91 = vmatprep.subr.mxu0 0.0
  %92 = vmatpush1.msra.mxu0 0.0
  %93 = vmatprep.subr.mxu0 0.0
  %94 = vmatpush1.msra.mxu0 0.0
  %95 = vmatprep.subr.mxu0 0.0
  %96 = vmatpush1.msra.mxu0 0.0
  %97 = vmatprep.subr.mxu0 0.0
  %98 = vmatpush1.msra.mxu0 0.0
  %99 = vmatprep.subr.mxu0 0.0
  %100 = vmatpush1.msra.mxu0 0.0
  %101 = vmatprep.subr.mxu0 0.0
  %102 = vmatpush1.msra.mxu0 0.0
  %103 = vmatprep.subr.mxu0 0.0
  %104 = vmatpush1.msra.mxu0 0.0
  %105 = vmatprep.subr.mxu0 0.0
  %106 = vmatpush1.msra.mxu0 0.0
  %107 = vmatprep.subr.mxu0 0.0
  %108 = vmatpush1.msra.mxu0 0.0
  %109 = vmatprep.subr.mxu0 0.0
  %110 = vmatpush1.msra.mxu0 0.0
  %111 = vmatprep.subr.mxu0 0.0
  %112 = vmatpush1.msra.mxu0 0.0
  %113 = vmatprep.subr.mxu0 0.0
  %114 = vmatpush1.msra.mxu0 0.0
  %115 = vmatprep.subr.mxu0 0.0
  %116 = vmatpush1.msra.mxu0 0.0
  %117 = vmatprep.subr.mxu0 0.0
  %118 = vmatpush1.msra.mxu0 0.0
  %119 = vmatprep.subr.mxu0 0.0
  %120 = vmatpush1.msra.mxu0 0.0
  %121 = vmatprep.subr.mxu0 0.0
  %122 = vmatpush1.msra.mxu0 0.0
  %123 = vmatprep.subr.mxu0 0.0
  %124 = vmatpush1.msra.mxu0 0.0
  %125 = vmatprep.subr.mxu0 0.0
  %126 = vmatpush1.msra.mxu0 0.0
  %127 = vmatprep.subr.mxu0 0.0
  %128 = vmatpush1.msra.mxu0 0.0
  %129 = vmatprep.subr.mxu0 0.0
  %130 = vmatpush1.msra.mxu0 0.0
  %131 = vmatprep.mubr.f32.mxu0 0.0
  %132 = vmatmul.mubr.f32.gmra.mrb[0].mxu0 %v44
  %v133 = vpop.f32.mrb[0].mxu0
  %v134 = vadd.f32 %v41, %v133
  %v135 = vpop.f32.mrb[0].mxu0
  %136 = vmatprep.mubr.f32.mxu0 0.0
  %137 = vmatmul.mubr.f32.gmra.mrb[0].mxu0 %v47
  %v138 = vpop.f32.mrb[0].mxu0
  %v139 = vadd.f32 %v41, %v138
  %v140 = vpop.f32.mrb[0].mxu0
  %141 = vmatprep.mubr.f32.mxu0 0.0
  %142 = vmatmul.mubr.f32.gmra.mrb[0].mxu0 %v50
  %v143 = vpop.f32.mrb[0].mxu0
  %v144 = vadd.f32 %v41, %v143
  %v145 = vpop.f32.mrb[0].mxu0
  %146 = vmatprep.mubr.f32.mxu0 0.0
  %147 = vmatmul.mubr.f32.gmra.mrb[0].mxu0 %v53
  %v148 = vpop.f32.mrb[0].mxu0
  %v149 = vadd.f32 %v41, %v148
  %v150 = vpop.f32.mrb[0].mxu0
  %151 = vmatprep.mubr.f32.mxu0 0.0
  %152 = vmatmul.mubr.f32.gmra.mrb[0].mxu0 %v56
  %v153 = vpop.f32.mrb[0].mxu0
  %v154 = vadd.f32 %v41, %v153
  %v155 = vpop.f32.mrb[0].mxu0
  %156 = vmatprep.mubr.f32.mxu0 0.0
  %157 = vmatmul.mubr.f32.gmra.mrb[0].mxu0 %v59
  %v158 = vpop.f32.mrb[0].mxu0
  %v159 = vadd.f32 %v41, %v158
  %v160 = vpop.f32.mrb[0].mxu0
  %161 = vmatprep.mubr.f32.mxu0 0.0
  %162 = vmatmul.mubr.f32.gmra.mrb[0].mxu0 %v62
  %v163 = vpop.f32.mrb[0].mxu0
  %v164 = vadd.f32 %v41, %v163
  %v165 = vpop.f32.mrb[0].mxu0
  %166 = vmatprep.mubr.f32.mxu0 0.0
  %167 = vmatmul.mubr.f32.gmra.mrb[0].mxu0 %v65
  %v168 = vpop.f32.mrb[0].mxu0
  %v169 = vadd.f32 %v41, %v168
  %v170 = vpop.f32.mrb[0].mxu0
  %171 = vdwg.mxu0
  %v172 = vtanh.pop %v134
  %v173 = vtanh.pop %v139
  %v174 = vtanh.pop %v144
  %v175 = vtanh.pop %v149
  %v176 = vtanh.pop %v154
  %v177 = vtanh.pop %v159
  %v178 = vtanh.pop %v164
  %v179 = vtanh.pop %v169
  %v180 = vld [vmem:[%s2] sm:$0xff]
  %v181 = vld [vmem:[%s2 + $0x8] sm:$0xff]
  %v182 = vld [vmem:[%s2 + $0x10] sm:$0xff]
  %v183 = vld [vmem:[%s2 + $0x18] sm:$0xff]
  %v184 = vlaneseq
  %v185 = vshrl.u32 %v184, 7
  %v186 = vsub.s32 0, %v185
  %v187 = vrot.slane %v21, %v186
  %vm188 = vcmask 261120
  %v190 = vsel %vm188, %v172, 0
  %v193 = vsel %vm188, %v173, 0
  %v196 = vsel %vm188, %v174, 0
  %v199 = vsel %vm188, %v175, 0
  %v202 = vsel %vm188, %v176, 0
  %v205 = vsel %vm188, %v177, 0
  %v208 = vsel %vm188, %v178, 0
  %v211 = vsel %vm188, %v179, 0
  %213 = vmatprep.subr.mxu0 0.0
  %214 = vmatpush1.msra.mxu0 %v180
  %215 = vmatprep.subr.mxu0 0.0
  %216 = vmatpush1.msra.mxu0 %v181
  %217 = vmatprep.subr.mxu0 0.0
  %218 = vmatpush1.msra.mxu0 %v182
  %219 = vmatprep.subr.mxu0 0.0
  %220 = vmatpush1.msra.mxu0 %v183
  %221 = vmatprep.subr.mxu0 0.0
  %222 = vmatpush1.msra.mxu0 0.0
  %223 = vmatprep.subr.mxu0 0.0
  %224 = vmatpush1.msra.mxu0 0.0
  %225 = vmatprep.subr.mxu0 0.0
  %226 = vmatpush1.msra.mxu0 0.0
  %227 = vmatprep.subr.mxu0 0.0
  %228 = vmatpush1.msra.mxu0 0.0
  %229 = vmatprep.subr.mxu0 0.0
  %230 = vmatpush1.msra.mxu0 0.0
  %231 = vmatprep.subr.mxu0 0.0
  %232 = vmatpush1.msra.mxu0 0.0
  %233 = vmatprep.subr.mxu0 0.0
  %234 = vmatpush1.msra.mxu0 0.0
  %235 = vmatprep.subr.mxu0 0.0
  %236 = vmatpush1.msra.mxu0 0.0
  %237 = vmatprep.subr.mxu0 0.0
  %238 = vmatpush1.msra.mxu0 0.0
  %239 = vmatprep.subr.mxu0 0.0
  %240 = vmatpush1.msra.mxu0 0.0
  %241 = vmatprep.subr.mxu0 0.0
  %242 = vmatpush1.msra.mxu0 0.0
  %243 = vmatprep.subr.mxu0 0.0
  %244 = vmatpush1.msra.mxu0 0.0
  %245 = vmatprep.subr.mxu0 0.0
  %246 = vmatpush1.msra.mxu0 0.0
  %247 = vmatprep.subr.mxu0 0.0
  %248 = vmatpush1.msra.mxu0 0.0
  %249 = vmatprep.subr.mxu0 0.0
  %250 = vmatpush1.msra.mxu0 0.0
  %251 = vmatprep.subr.mxu0 0.0
  %252 = vmatpush1.msra.mxu0 0.0
  %253 = vmatprep.subr.mxu0 0.0
  %254 = vmatpush1.msra.mxu0 0.0
  %255 = vmatprep.subr.mxu0 0.0
  %256 = vmatpush1.msra.mxu0 0.0
  %257 = vmatprep.subr.mxu0 0.0
  %258 = vmatpush1.msra.mxu0 0.0
  %259 = vmatprep.subr.mxu0 0.0
  %260 = vmatpush1.msra.mxu0 0.0
  %261 = vmatprep.subr.mxu0 0.0
  %262 = vmatpush1.msra.mxu0 0.0
  %263 = vmatprep.subr.mxu0 0.0
  %264 = vmatpush1.msra.mxu0 0.0
  %265 = vmatprep.subr.mxu0 0.0
  %266 = vmatpush1.msra.mxu0 0.0
  %267 = vmatprep.subr.mxu0 0.0
  %268 = vmatpush1.msra.mxu0 0.0
  %269 = vmatprep.subr.mxu0 0.0
  %270 = vmatpush1.msra.mxu0 0.0
  %271 = vmatprep.subr.mxu0 0.0
  %272 = vmatpush1.msra.mxu0 0.0
  %273 = vmatprep.subr.mxu0 0.0
  %274 = vmatpush1.msra.mxu0 0.0
  %275 = vmatprep.subr.mxu0 0.0
  %276 = vmatpush1.msra.mxu0 0.0
  %277 = vmatprep.mubr.f32.mxu0 0.0
  %278 = vmatmul.mubr.f32.gmra.mrb[0].mxu0 %v190
  %v279 = vpop.f32.mrb[0].mxu0
  %v280 = vadd.f32 %v187, %v279
  %v281 = vpop.f32.mrb[0].mxu0
  %282 = vmatprep.mubr.f32.mxu0 0.0
  %283 = vmatmul.mubr.f32.gmra.mrb[0].mxu0 %v193
  %v284 = vpop.f32.mrb[0].mxu0
  %v285 = vadd.f32 %v187, %v284
  %v286 = vpop.f32.mrb[0].mxu0
  %287 = vmatprep.mubr.f32.mxu0 0.0
  %288 = vmatmul.mubr.f32.gmra.mrb[0].mxu0 %v196
  %v289 = vpop.f32.mrb[0].mxu0
  %v290 = vadd.f32 %v187, %v289
  %v291 = vpop.f32.mrb[0].mxu0
  %292 = vmatprep.mubr.f32.mxu0 0.0
  %293 = vmatmul.mubr.f32.gmra.mrb[0].mxu0 %v199
  %v294 = vpop.f32.mrb[0].mxu0
  %v295 = vadd.f32 %v187, %v294
  %v296 = vpop.f32.mrb[0].mxu0
  %297 = vmatprep.mubr.f32.mxu0 0.0
  %298 = vmatmul.mubr.f32.gmra.mrb[0].mxu0 %v202
  %v299 = vpop.f32.mrb[0].mxu0
  %v300 = vadd.f32 %v187, %v299
  %v301 = vpop.f32.mrb[0].mxu0
  %302 = vmatprep.mubr.f32.mxu0 0.0
  %303 = vmatmul.mubr.f32.gmra.mrb[0].mxu0 %v205
  %v304 = vpop.f32.mrb[0].mxu0
  %v305 = vadd.f32 %v187, %v304
  %v306 = vpop.f32.mrb[0].mxu0
  %307 = vmatprep.mubr.f32.mxu0 0.0
  %308 = vmatmul.mubr.f32.gmra.mrb[0].mxu0 %v208
  %v309 = vpop.f32.mrb[0].mxu0
  %v310 = vadd.f32 %v187, %v309
  %v311 = vpop.f32.mrb[0].mxu0
  %312 = vmatprep.mubr.f32.mxu0 0.0
  %313 = vmatmul.mubr.f32.gmra.mrb[0].mxu0 %v211
  %v314 = vpop.f32.mrb[0].mxu0
  %v315 = vadd.f32 %v187, %v314
  %v316 = vpop.f32.mrb[0].mxu0
  %317 = vdwg.mxu0
  %v318 = vmul.f32 %v280, 0.5
  %v319 = vmul.f32 %v285, 0.5
  %v320 = vmul.f32 %v290, 0.5
  %v321 = vmul.f32 %v295, 0.5
  %v322 = vmul.f32 %v300, 0.5
  %v323 = vmul.f32 %v305, 0.5
  %v324 = vmul.f32 %v310, 0.5
  %v325 = vmul.f32 %v315, 0.5
  %v326 = vmul.f32 %v318, 1.442695
  %v327 = vpow.pop %v326
  %v328 = vmul.f32 %v319, 1.442695
  %v329 = vpow.pop %v328
  %v330 = vmul.f32 %v320, 1.442695
  %v331 = vpow.pop %v330
  %v332 = vmul.f32 %v321, 1.442695
  %v333 = vpow.pop %v332
  %v334 = vmul.f32 %v322, 1.442695
  %v335 = vpow.pop %v334
  %v336 = vmul.f32 %v323, 1.442695
  %v337 = vpow.pop %v336
  %v338 = vmul.f32 %v324, 1.442695
  %v339 = vpow.pop %v338
  %v340 = vmul.f32 %v325, 1.442695
  %v341 = vpow.pop %v340
  %v342 = vmax.f32 %v327, 1e-10
  %v343 = vmax.f32 %v329, 1e-10
  %v344 = vmax.f32 %v331, 1e-10
  %v345 = vmax.f32 %v333, 1e-10
  %v346 = vmax.f32 %v335, 1e-10
  %v347 = vmax.f32 %v337, 1e-10
  %v348 = vmax.f32 %v339, 1e-10
  %v349 = vmax.f32 %v341, 1e-10
  %v350 = vmul.f32 %v342, %v342
  %v351 = vmul.f32 %v343, %v343
  %v352 = vmul.f32 %v344, %v344
  %v353 = vmul.f32 %v345, %v345
  %v354 = vmul.f32 %v346, %v346
  %v355 = vmul.f32 %v347, %v347
  %v356 = vmul.f32 %v348, %v348
  %v357 = vmul.f32 %v349, %v349
  %v358 = vld [vmem:[%s4] sm:$0xff]
  %v359 = vld [vmem:[%s4 + $0x8] sm:$0xff]
  %v360 = vld [vmem:[%s4 + $0x10] sm:$0xff]
  %v361 = vld [vmem:[%s4 + $0x18] sm:$0xff]
  %v362 = vld [vmem:[%s4 + $0x20] sm:$0xff]
  %v363 = vld [vmem:[%s4 + $0x28] sm:$0xff]
  %v364 = vld [vmem:[%s4 + $0x30] sm:$0xff]
  %v365 = vld [vmem:[%s4 + $0x38] sm:$0xff]
  %374 = vrot.lane.b32.xlu0 %v358, 16
  %v375 = vpop.permute.xlu0 %374
  %376 = vrot.lane.b32.xlu0 %v359, 16
  %v377 = vpop.permute.xlu0 %376
  %378 = vrot.lane.b32.xlu0 %v360, 16
  %v379 = vpop.permute.xlu0 %378
  %380 = vrot.lane.b32.xlu0 %v361, 16
  %v381 = vpop.permute.xlu0 %380
  %382 = vrot.lane.b32.xlu0 %v362, 16
  %v383 = vpop.permute.xlu0 %382
  %384 = vrot.lane.b32.xlu0 %v363, 16
  %v385 = vpop.permute.xlu0 %384
  %386 = vrot.lane.b32.xlu0 %v364, 16
  %v387 = vpop.permute.xlu0 %386
  %388 = vrot.lane.b32.xlu0 %v365, 16
  %v389 = vpop.permute.xlu0 %388
  %v398 = vmul.f32 %v342, %v375
  %v399 = vmul.f32 %v343, %v377
  %v400 = vmul.f32 %v344, %v379
  %v401 = vmul.f32 %v345, %v381
  %v402 = vmul.f32 %v346, %v383
  %v403 = vmul.f32 %v347, %v385
  %v404 = vmul.f32 %v348, %v387
  %v405 = vmul.f32 %v349, %v389
  %414 = vrot.lane.b32.xlu0 %v398, 112
  %v415 = vpop.permute.xlu0 %414
  %416 = vrot.lane.b32.xlu0 %v399, 112
  %v417 = vpop.permute.xlu0 %416
  %418 = vrot.lane.b32.xlu0 %v400, 112
  %v419 = vpop.permute.xlu0 %418
  %420 = vrot.lane.b32.xlu0 %v401, 112
  %v421 = vpop.permute.xlu0 %420
  %422 = vrot.lane.b32.xlu0 %v402, 112
  %v423 = vpop.permute.xlu0 %422
  %424 = vrot.lane.b32.xlu0 %v403, 112
  %v425 = vpop.permute.xlu0 %424
  %426 = vrot.lane.b32.xlu0 %v404, 112
  %v427 = vpop.permute.xlu0 %426
  %428 = vrot.lane.b32.xlu0 %v405, 112
  %v429 = vpop.permute.xlu0 %428
  %v438 = vadd.f32 %v280, %v415
  %v439 = vadd.f32 %v285, %v417
  %v440 = vadd.f32 %v290, %v419
  %v441 = vadd.f32 %v295, %v421
  %v442 = vadd.f32 %v300, %v423
  %v443 = vadd.f32 %v305, %v425
  %v444 = vadd.f32 %v310, %v427
  %v445 = vadd.f32 %v315, %v429
  %454 = vrot.lane.b32.xlu0 %v280, 16
  %v455 = vpop.permute.xlu0 %454
  %456 = vrot.lane.b32.xlu0 %v285, 16
  %v457 = vpop.permute.xlu0 %456
  %458 = vrot.lane.b32.xlu0 %v290, 16
  %v459 = vpop.permute.xlu0 %458
  %460 = vrot.lane.b32.xlu0 %v295, 16
  %v461 = vpop.permute.xlu0 %460
  %462 = vrot.lane.b32.xlu0 %v300, 16
  %v463 = vpop.permute.xlu0 %462
  %464 = vrot.lane.b32.xlu0 %v305, 16
  %v465 = vpop.permute.xlu0 %464
  %466 = vrot.lane.b32.xlu0 %v310, 16
  %v467 = vpop.permute.xlu0 %466
  %468 = vrot.lane.b32.xlu0 %v315, 16
  %v469 = vpop.permute.xlu0 %468
  %486 = vrot.lane.b32.xlu0 %v350, 16
  %v487 = vpop.permute.xlu0 %486
  %488 = vrot.lane.b32.xlu0 %v351, 16
  %v489 = vpop.permute.xlu0 %488
  %490 = vrot.lane.b32.xlu0 %v352, 16
  %v491 = vpop.permute.xlu0 %490
  %492 = vrot.lane.b32.xlu0 %v353, 16
  %v493 = vpop.permute.xlu0 %492
  %494 = vrot.lane.b32.xlu0 %v354, 16
  %v495 = vpop.permute.xlu0 %494
  %496 = vrot.lane.b32.xlu0 %v355, 16
  %v497 = vpop.permute.xlu0 %496
  %498 = vrot.lane.b32.xlu0 %v356, 16
  %v499 = vpop.permute.xlu0 %498
  %500 = vrot.lane.b32.xlu0 %v357, 16
  %v501 = vpop.permute.xlu0 %500
  %vm510 = vcmask 130048
  %v511 = vsel %vm510, %v438, %v455
  %v512 = vsel %vm510, %v439, %v457
  %v513 = vsel %vm510, %v440, %v459
  %v514 = vsel %vm510, %v441, %v461
  %v515 = vsel %vm510, %v442, %v463
  %v516 = vsel %vm510, %v443, %v465
  %v517 = vsel %vm510, %v444, %v467
  %v518 = vsel %vm510, %v445, %v469
  %v519 = vsel %vm188, %v511, %v487
  %v520 = vsel %vm188, %v512, %v489
  %v521 = vsel %vm188, %v513, %v491
  %v522 = vsel %vm188, %v514, %v493
  %v523 = vsel %vm188, %v515, %v495
  %v524 = vsel %vm188, %v516, %v497
  %v525 = vsel %vm188, %v517, %v499
  %v526 = vsel %vm188, %v518, %v501
  %vm527 = vcmask 392192
  %528 = vst.msk [vmem:[%s5] sm:$0xff] %vm527, %v519
  %529 = vst.msk [vmem:[%s5 + $0x8] sm:$0xff] %vm527, %v520
  %530 = vst.msk [vmem:[%s5 + $0x10] sm:$0xff] %vm527, %v521
  %531 = vst.msk [vmem:[%s5 + $0x18] sm:$0xff] %vm527, %v522
  %532 = vst.msk [vmem:[%s5 + $0x20] sm:$0xff] %vm527, %v523
  %533 = vst.msk [vmem:[%s5 + $0x28] sm:$0xff] %vm527, %v524
  %534 = vst.msk [vmem:[%s5 + $0x30] sm:$0xff] %vm527, %v525
  %535 = vst.msk [vmem:[%s5 + $0x38] sm:$0xff] %vm527, %v526
  // Predicated region
  $region22: #{tpu_custom_call.1} parent=0 // pred_check
    _
  $region23: #{tpu_custom_call.1} parent=0 // pred_check_branch
    %537 = sbr.rel (0) target = $region25
  $region24: #{tpu_custom_call.1} parent=0 // pred_region
    _
  $region25: #{tpu_custom_call.1} parent=0 // pred_fallthru
    _
  // Predicated region
  $region26: #{tpu_custom_call.1} parent=0 // pred_check
    _
  $region27: #{tpu_custom_call.1} parent=0 // pred_check_branch
    %539 = sbr.rel (0) target = $region29
  $region28: #{tpu_custom_call.1} parent=0 // pred_region
    _
  $region29: #{tpu_custom_call.1} parent=0 // pred_fallthru
    _

</llo_original>
